<compile_context>
chip_gen: v6e
topology: v6e:2x2x1
jax: 0.10.0
libtpu: 0.0.40
codegen_flags: <defaults>
</compile_context>

<pallas_src>
from functools import partial

import numpy as np
import jax
import jax.numpy as jnp
from jax.experimental import pallas as pl
from jax.experimental.pallas import tpu as pltpu


# ----------------------------------------------------------------------------
# Base anchor generation (pure setup math, deterministic, tiny -> plain numpy)
# ----------------------------------------------------------------------------
def generate_anchors(base_size=16, ratios=None, scales=None):
    if ratios is None:
        ratios = np.array([0.5, 1, 2])
    if scales is None:
        scales = np.array([2 ** 0, 2 ** (1.0 / 3.0), 2 ** (2.0 / 3.0)])
    num_anchors = len(ratios) * len(scales)
    anchors = np.zeros((num_anchors, 4))
    anchors[:, 2:] = base_size * np.tile(scales, (2, len(ratios))).T
    areas = anchors[:, 2] * anchors[:, 3]
    anchors[:, 2] = np.sqrt(areas / np.repeat(ratios, len(scales)))
    anchors[:, 3] = anchors[:, 2] * np.repeat(ratios, len(scales))
    anchors[:, 0::2] -= np.tile(anchors[:, 2] * 0.5, (2, 1)).T
    anchors[:, 1::2] -= np.tile(anchors[:, 3] * 0.5, (2, 1)).T
    return anchors


# Numpy reference for correctness checking (identical to the PyTorch module).
def shift_ref(shape, stride, anchors):
    shift_x = (np.arange(0, shape[1]) + 0.5) * stride
    shift_y = (np.arange(0, shape[0]) + 0.5) * stride
    shift_x, shift_y = np.meshgrid(shift_x, shift_y)
    shifts = np.vstack(
        (shift_x.ravel(), shift_y.ravel(), shift_x.ravel(), shift_y.ravel())
    ).transpose()
    A = anchors.shape[0]
    K = shifts.shape[0]
    all_anchors = anchors.reshape((1, A, 4)) + shifts.reshape((1, K, 4)).transpose((1, 0, 2))
    return all_anchors.reshape((K * A, 4))


def _round_up(x, m):
    return ((x + m - 1) // m) * m


def _choose_tile(k_total, *, max_tk=2048, target_tiles=4):
    # Big tiles amortize the ~0.35us per-grid-step overhead; keeping >= ~4
    # steps lets the "parallel" axis shard across both v7x TensorCores.
    tk = _round_up(max(1, -(-k_total // target_tiles)), 128)
    return int(max(128, min(max_tk, tk)))


# ----------------------------------------------------------------------------
# Fused Pallas kernel: all pyramid levels, transposed lane-dense output slab.
#   base_ref : (L, A*4, 1) f32  base anchors; row r = coord r%4 of anchor r//4
#   shift_ref: (2, TK)     f32  row0 = x-shift, row1 = y-shift per grid cell
#   lvl_ref  : (1, TK)     i32  pyramid-level id per grid cell (column)
#   out_ref  : (A*4, TK)   f32  out[r, c] = base[lvl(c), r] + (sx if r even else sy)
# ----------------------------------------------------------------------------
def fused_shift_kernel(base_ref, shift_ref, lvl_ref, out_ref, *, num_levels):
    ac = out_ref.shape[0]
    sx = shift_ref[0:1, :]                                   # (1, TK)
    sy = shift_ref[1:2, :]                                   # (1, TK)
    row = jax.lax.broadcasted_iota(jnp.int32, (ac, 1), 0)    # (A*4, 1), tiny
    is_x = (row % 2) == 0
    acc = jnp.where(is_x, sx, sy)                            # (A*4, TK)
    lvl = lvl_ref[...]                                       # (1, TK)
    # Per-column base-anchor selection: unrolled mask*base accumulation over
    # the (static, small) number of levels.  Tiles may straddle level
    # boundaries, which keeps the output slab contiguous (no inter-level pad).
    for l in range(num_levels):
        mask = (lvl == l).astype(jnp.float32)                # (1, TK)
        acc = acc + base_ref[l] * mask                       # (A*4,1)*(1,TK) -> (A*4,TK)
    out_ref[...] = acc


@partial(jax.jit, static_argnames=("k_total", "tk"))
def _fused_shift_call(bases, shifts, lvls, *, k_total, tk):
    num_levels, ac, _ = bases.shape
    kpad = shifts.shape[1]
    num_tiles = kpad // tk
    slab = pl.pallas_call(
        partial(fused_shift_kernel, num_levels=num_levels),
        out_shape=jax.ShapeDtypeStruct((ac, kpad), jnp.float32),
        grid=(num_tiles,),
        in_specs=[
            pl.BlockSpec((num_levels, ac, 1), lambda i: (0, 0, 0)),  # resident bases
            pl.BlockSpec((2, tk), lambda i: (0, i)),                 # sx / sy columns
            pl.BlockSpec((1, tk), lambda i: (0, i)),                 # level id columns
        ],
        out_specs=pl.BlockSpec((ac, tk), lambda i: (0, i)),
        compiler_params=pltpu.CompilerParams(
            dimension_semantics=("parallel",)),
    )(bases, shifts, lvls)
    # Single slice + single transpose + reshape back to the reference layout:
    # (A*4, Kpad) -> (K_total, A*4) -> (K_total*A, 4).
    return slab[:, :k_total].T.reshape(k_total * (ac // 4), 4)


# ----------------------------------------------------------------------------
# Anchors module forward (no learnable parameters in the original module).
# ----------------------------------------------------------------------------
class Anchors:
    def __init__(self, pyramid_levels=None, strides=None, sizes=None,
                 ratios=None, scales=None):
        self.pyramid_levels = pyramid_levels if pyramid_levels is not None else [3, 4, 5, 6, 7]
        self.strides = strides if strides is not None else [2 ** x for x in self.pyramid_levels]
        self.sizes = sizes if sizes is not None else [2 ** (x + 2) for x in self.pyramid_levels]
        self.ratios = ratios if ratios is not None else np.array([0.5, 1, 2])
        self.scales = scales if scales is not None else np.array(
            [2 ** 0, 2 ** (1.0 / 3.0), 2 ** (2.0 / 3.0)])
        # Result depends only on (H, W): cache it so the kernel runs once per shape.
        self._cache = {}

    def _build_tables(self, image_hw):
        image_shape = np.array(image_hw)
        image_shapes = [(image_shape + 2 ** x - 1) // (2 ** x)
                        for x in self.pyramid_levels]
        bases, sx_l, sy_l, lvl_l = [], [], [], []
        for idx, _p in enumerate(self.pyramid_levels):
            base = generate_anchors(base_size=self.sizes[idx],
                                    ratios=self.ratios, scales=self.scales)
            bases.append(base.reshape(-1, 1))                       # (A*4, 1)
            h, w = int(image_shapes[idx][0]), int(image_shapes[idx][1])
            stride = float(self.strides[idx])
            shift_x = (np.arange(0, w) + 0.5) * stride
            shift_y = (np.arange(0, h) + 0.5) * stride
            sxg, syg = np.meshgrid(shift_x, shift_y)
            sx_l.append(sxg.ravel())
            sy_l.append(syg.ravel())
            lvl_l.append(np.full(h * w, idx, dtype=np.int32))
        bases = np.stack(bases, axis=0).astype(np.float32)          # (L, A*4, 1)
        sx = np.concatenate(sx_l)
        sy = np.concatenate(sy_l)
        lvl = np.concatenate(lvl_l)
        return bases, sx, sy, lvl, int(sx.shape[0])

    def __call__(self, image):
        # image: (B, C, H, W) — only static spatial dims are used.
        hw = (int(image.shape[2]), int(image.shape[3]))
        cached = self._cache.get(hw)
        if cached is not None:
            return cached

        bases, sx, sy, lvl, k_total = self._build_tables(hw)
        tk = _choose_tile(k_total)
        num_tiles = -(-k_total // tk)
        kpad = num_tiles * tk

        shifts = np.zeros((2, kpad), dtype=np.float32)
        shifts[0, :k_total] = sx
        shifts[1, :k_total] = sy
        lvls = np.zeros((1, kpad), dtype=np.int32)
        lvls[0, :k_total] = lvl

        flat = _fused_shift_call(jnp.asarray(bases), jnp.asarray(shifts),
                                 jnp.asarray(lvls), k_total=k_total, tk=tk)
        out = jnp.expand_dims(flat, axis=0).astype(jnp.float32)
        self._cache[hw] = out
        return out

    # Pure-numpy reference (mirrors the PyTorch module) for verification.
    def reference(self, image):
        image_shape = np.array(image.shape[2:])
        image_shapes = [(image_shape + 2 ** x - 1) // (2 ** x)
                        for x in self.pyramid_levels]
        all_anchors = np.zeros((0, 4)).astype(np.float32)
        for idx, _p in enumerate(self.pyramid_levels):
            base = generate_anchors(base_size=self.sizes[idx],
                                    ratios=self.ratios, scales=self.scales)
            shifted = shift_ref(image_shapes[idx], self.strides[idx], base)
            all_anchors = np.append(all_anchors, shifted, axis=0)
        return np.expand_dims(all_anchors, axis=0).astype(np.float32)


if __name__ == "__main__":
    key = jax.random.PRNGKey(0)
    # Small NCHW image consistent with the module's usage: (B=2, C=4, H=16, W=16)
    image = jax.random.normal(key, (2, 4, 16, 16), dtype=jnp.float32)

    anchors_mod = Anchors()
    out = anchors_mod(image)
    out = jax.block_until_ready(out)

    ref = anchors_mod.reference(np.asarray(image))
    assert out.shape == ref.shape, (out.shape, ref.shape)
    assert out.dtype == jnp.float32
    np.testing.assert_allclose(np.asarray(out), ref, rtol=1e-5, atol=1e-4)

    # Second call hits the per-shape cache (kernel not re-run).
    out2 = jax.block_until_ready(anchors_mod(image))
    np.testing.assert_allclose(np.asarray(out2), ref, rtol=1e-5, atol=1e-4)

    print("KERNEL_OK")
</pallas_src>

<mosaic_0001>
module attributes {stable_mosaic.version = 11 : i64} {
  func.func @fused_shift_kernel(%arg0: i32, %arg1: memref<5x36x1xf32, #tpu.memory_space<vmem>>, %arg2: memref<2x128xf32, #tpu.memory_space<vmem>>, %arg3: memref<1x128xi32, #tpu.memory_space<vmem>>, %arg4: memref<36x128xf32, #tpu.memory_space<vmem>>) attributes {dimension_semantics = [#tpu.dimension_semantics<parallel>], iteration_bounds = array<i64: 1>, scalar_prefetch = 0 : i64, scratch_operands = 0 : i64, tpu.core_type = #tpu.core_type<tc>, window_params = [{pipeline_mode = #tpu.pipeline_mode<synchronous>, transform_indices = @transform_0, window_bounds = array<i64: 5, 36, 1>}, {transform_indices = @transform_1, window_bounds = array<i64: 2, 128>}, {transform_indices = @transform_2, window_bounds = array<i64: 1, 128>}, {transform_indices = @transform_3, window_bounds = array<i64: 36, 128>}]} {
    %c0 = arith.constant 0 : index
    %c0_0 = arith.constant 0 : index
    %0 = vector.load %arg2[%c0, %c0_0] : memref<2x128xf32, #tpu.memory_space<vmem>>, vector<1x128xf32>
    %c1 = arith.constant 1 : index
    %c0_1 = arith.constant 0 : index
    %1 = vector.load %arg2[%c1, %c0_1] : memref<2x128xf32, #tpu.memory_space<vmem>>, vector<1x128xf32>
    %2 = tpu.iota {dimensions = array<i32: 0>} : vector<36x1xi32>
    %c2_i32 = arith.constant 2 : i32
    %c0_i32 = arith.constant 0 : i32
    %3 = arith.cmpi eq, %c2_i32, %c0_i32 : i32
    %c1_i32 = arith.constant 1 : i32
    %4 = arith.select %3, %c1_i32, %c2_i32 : i32
    %5 = vector.broadcast %4 : i32 to vector<36x1xi32>
    %6 = arith.remsi %2, %5 : vector<36x1xi32>
    %c0_i32_2 = arith.constant 0 : i32
    %7 = vector.broadcast %c0_i32_2 : i32 to vector<36x1xi32>
    %8 = arith.cmpi ne, %6, %7 : vector<36x1xi32>
    %c0_i32_3 = arith.constant 0 : i32
    %9 = vector.broadcast %c0_i32_3 : i32 to vector<36x1xi32>
    %10 = arith.cmpi slt, %6, %9 : vector<36x1xi32>
    %c0_i32_4 = arith.constant 0 : i32
    %11 = arith.cmpi slt, %4, %c0_i32_4 : i32
    %12 = vector.broadcast %11 : i1 to vector<36x1xi1>
    %13 = vector.broadcast %12 : vector<36x1xi1> to vector<36x1xi1>
    %14 = arith.xori %10, %13 : vector<36x1xi1>
    %15 = arith.andi %14, %8 : vector<36x1xi1>
    %16 = vector.broadcast %4 : i32 to vector<36x1xi32>
    %17 = arith.addi %6, %16 : vector<36x1xi32>
    %18 = arith.select %15, %17, %6 : vector<36x1xi1>, vector<36x1xi32>
    %c0_i32_5 = arith.constant 0 : i32
    %19 = vector.broadcast %c0_i32_5 : i32 to vector<36x1xi32>
    %20 = arith.cmpi eq, %18, %19 : vector<36x1xi32>
    %21 = vector.shape_cast %20 : vector<36x1xi1> to vector<36x1xi1>
    %22 = vector.broadcast %21 : vector<36x1xi1> to vector<36x128xi1>
    %23 = vector.shape_cast %0 : vector<1x128xf32> to vector<1x128xf32>
    %24 = vector.broadcast %23 : vector<1x128xf32> to vector<36x128xf32>
    %25 = vector.shape_cast %1 : vector<1x128xf32> to vector<1x128xf32>
    %26 = vector.broadcast %25 : vector<1x128xf32> to vector<36x128xf32>
    %27 = arith.select %22, %24, %26 : vector<36x128xi1>, vector<36x128xf32>
    %c0_6 = arith.constant 0 : index
    %c0_7 = arith.constant 0 : index
    %28 = vector.load %arg3[%c0_6, %c0_7] : memref<1x128xi32, #tpu.memory_space<vmem>>, vector<1x128xi32>
    %c0_i32_8 = arith.constant 0 : i32
    %29 = vector.broadcast %c0_i32_8 : i32 to vector<1x128xi32>
    %30 = arith.cmpi eq, %28, %29 : vector<1x128xi32>
    %31 = arith.extui %30 : vector<1x128xi1> to vector<1x128xi32>
    %32 = arith.sitofp %31 : vector<1x128xi32> to vector<1x128xf32>
    %c0_9 = arith.constant 0 : index
    %c0_10 = arith.constant 0 : index
    %c0_11 = arith.constant 0 : index
    %33 = vector.load %arg1[%c0_9, %c0_10, %c0_11] : memref<5x36x1xf32, #tpu.memory_space<vmem>>, vector<1x36x1xf32>
    %34 = vector.shape_cast %33 : vector<1x36x1xf32> to vector<36x1xf32>
    %35 = vector.broadcast %34 : vector<36x1xf32> to vector<36x128xf32>
    %36 = vector.broadcast %32 : vector<1x128xf32> to vector<36x128xf32>
    %37 = arith.mulf %35, %36 : vector<36x128xf32>
    %38 = arith.addf %27, %37 : vector<36x128xf32>
    %c1_i32_12 = arith.constant 1 : i32
    %39 = vector.broadcast %c1_i32_12 : i32 to vector<1x128xi32>
    %40 = arith.cmpi eq, %28, %39 : vector<1x128xi32>
    %41 = arith.extui %40 : vector<1x128xi1> to vector<1x128xi32>
    %42 = arith.sitofp %41 : vector<1x128xi32> to vector<1x128xf32>
    %c1_13 = arith.constant 1 : index
    %c0_14 = arith.constant 0 : index
    %c0_15 = arith.constant 0 : index
    %43 = vector.load %arg1[%c1_13, %c0_14, %c0_15] : memref<5x36x1xf32, #tpu.memory_space<vmem>>, vector<1x36x1xf32>
    %44 = vector.shape_cast %43 : vector<1x36x1xf32> to vector<36x1xf32>
    %45 = vector.broadcast %44 : vector<36x1xf32> to vector<36x128xf32>
    %46 = vector.broadcast %42 : vector<1x128xf32> to vector<36x128xf32>
    %47 = arith.mulf %45, %46 : vector<36x128xf32>
    %48 = arith.addf %38, %47 : vector<36x128xf32>
    %c2_i32_16 = arith.constant 2 : i32
    %49 = vector.broadcast %c2_i32_16 : i32 to vector<1x128xi32>
    %50 = arith.cmpi eq, %28, %49 : vector<1x128xi32>
    %51 = arith.extui %50 : vector<1x128xi1> to vector<1x128xi32>
    %52 = arith.sitofp %51 : vector<1x128xi32> to vector<1x128xf32>
    %c2 = arith.constant 2 : index
    %c0_17 = arith.constant 0 : index
    %c0_18 = arith.constant 0 : index
    %53 = vector.load %arg1[%c2, %c0_17, %c0_18] : memref<5x36x1xf32, #tpu.memory_space<vmem>>, vector<1x36x1xf32>
    %54 = vector.shape_cast %53 : vector<1x36x1xf32> to vector<36x1xf32>
    %55 = vector.broadcast %54 : vector<36x1xf32> to vector<36x128xf32>
    %56 = vector.broadcast %52 : vector<1x128xf32> to vector<36x128xf32>
    %57 = arith.mulf %55, %56 : vector<36x128xf32>
    %58 = arith.addf %48, %57 : vector<36x128xf32>
    %c3_i32 = arith.constant 3 : i32
    %59 = vector.broadcast %c3_i32 : i32 to vector<1x128xi32>
    %60 = arith.cmpi eq, %28, %59 : vector<1x128xi32>
    %61 = arith.extui %60 : vector<1x128xi1> to vector<1x128xi32>
    %62 = arith.sitofp %61 : vector<1x128xi32> to vector<1x128xf32>
    %c3 = arith.constant 3 : index
    %c0_19 = arith.constant 0 : index
    %c0_20 = arith.constant 0 : index
    %63 = vector.load %arg1[%c3, %c0_19, %c0_20] : memref<5x36x1xf32, #tpu.memory_space<vmem>>, vector<1x36x1xf32>
    %64 = vector.shape_cast %63 : vector<1x36x1xf32> to vector<36x1xf32>
    %65 = vector.broadcast %64 : vector<36x1xf32> to vector<36x128xf32>
    %66 = vector.broadcast %62 : vector<1x128xf32> to vector<36x128xf32>
    %67 = arith.mulf %65, %66 : vector<36x128xf32>
    %68 = arith.addf %58, %67 : vector<36x128xf32>
    %c4_i32 = arith.constant 4 : i32
    %69 = vector.broadcast %c4_i32 : i32 to vector<1x128xi32>
    %70 = arith.cmpi eq, %28, %69 : vector<1x128xi32>
    %71 = arith.extui %70 : vector<1x128xi1> to vector<1x128xi32>
    %72 = arith.sitofp %71 : vector<1x128xi32> to vector<1x128xf32>
    %c4 = arith.constant 4 : index
    %c0_21 = arith.constant 0 : index
    %c0_22 = arith.constant 0 : index
    %73 = vector.load %arg1[%c4, %c0_21, %c0_22] : memref<5x36x1xf32, #tpu.memory_space<vmem>>, vector<1x36x1xf32>
    %74 = vector.shape_cast %73 : vector<1x36x1xf32> to vector<36x1xf32>
    %75 = vector.broadcast %74 : vector<36x1xf32> to vector<36x128xf32>
    %76 = vector.broadcast %72 : vector<1x128xf32> to vector<36x128xf32>
    %77 = arith.mulf %75, %76 : vector<36x128xf32>
    %78 = arith.addf %68, %77 : vector<36x128xf32>
    %c0_23 = arith.constant 0 : index
    %c0_24 = arith.constant 0 : index
    %79 = vector.load %arg4[%c0_23, %c0_24] : memref<36x128xf32, #tpu.memory_space<vmem>>, vector<36x128xf32>
    tpu.vector_store %arg4[%c0_23, %c0_24], %78 {strides = array<i32>} : memref<36x128xf32, #tpu.memory_space<vmem>>, vector<36x128xf32>,
    return
  }
  func.func @transform_0(%arg0: i32) -> (i32, i32, i32) {
    %c0_i32 = arith.constant 0 : i32
    %c0_i32_0 = arith.constant 0 : i32
    %c0_i32_1 = arith.constant 0 : i32
    %c0_i32_2 = arith.constant 0 : i32
    return %c0_i32, %c0_i32_0, %c0_i32_1 : i32, i32, i32
  }
  func.func @transform_1(%arg0: i32) -> (i32, i32) {
    %c0_i32 = arith.constant 0 : i32
    %c0_i32_0 = arith.constant 0 : i32
    return %c0_i32, %arg0 : i32, i32
  }
  func.func @transform_2(%arg0: i32) -> (i32, i32) {
    %c0_i32 = arith.constant 0 : i32
    %c0_i32_0 = arith.constant 0 : i32
    return %c0_i32, %arg0 : i32, i32
  }
  func.func @transform_3(%arg0: i32) -> (i32, i32) {
    %c0_i32 = arith.constant 0 : i32
    %c0_i32_0 = arith.constant 0 : i32
    return %c0_i32, %arg0 : i32, i32
  }
}

</mosaic_0001>

<llo_original>
// kernel: _fused_shift_call.1
$region0: #{_fused_shift_call.1}
  #allocation0 [shape = 'u32[]', space=smem, size = 0x4, offset = 0x4, fixed_abs, tag = 'smem constant byte address 0x4 - core index']
  #allocation1 [shape = 'u32[144,128]{1,0:T(1,128)}', space=vmem, size = 0x12000, scoped, tag = 'internal scratch']
  %s0 = inlined_call_operand.vmem [shape: f32[5,36,1], index: 0, kind: input, shape index: {}]
  %s1 = inlined_call_operand.vmem [shape: f32[2,128], index: 1, kind: input, shape index: {}]
  %s2 = inlined_call_operand.vmem [shape: s32[1,128], index: 2, kind: input, shape index: {}]
  %s3 = inlined_call_operand.vmem [shape: f32[36,128], index: 3, kind: output, shape index: {}]
  %s4 = sld [smem:[#allocation0]]
  $region22: #{_fused_shift_call.1} parent=0
    _
  %s6 = ssub.s32 1, %s4
  %s7 = scalar_select 0, %s6, %s4
  // Predicated region
  $region2: #{_fused_shift_call.1} parent=0 // pred_check
    _
  $region3: #{_fused_shift_call.1} parent=0 // pred_check_branch
    %9 = sbr.rel (0) target = $region5
  $region4: #{_fused_shift_call.1} parent=0 // pred_region
    _
  $region5: #{_fused_shift_call.1} parent=0 // pred_fallthru
    _
  // Predicated region
  $region6: #{_fused_shift_call.1} parent=0 // pred_check
    _
  $region7: #{_fused_shift_call.1} parent=0 // pred_check_branch
    %11 = sbr.rel (0) target = $region9
  $region8: #{_fused_shift_call.1} parent=0 // pred_region
    _
  $region9: #{_fused_shift_call.1} parent=0 // pred_fallthru
    _
  // Predicated region
  $region10: #{_fused_shift_call.1} parent=0 // pred_check
    _
  $region11: #{_fused_shift_call.1} parent=0 // pred_check_branch
    %13 = sbr.rel (0) target = $region13
  $region12: #{_fused_shift_call.1} parent=0 // pred_region
    _
  $region13: #{_fused_shift_call.1} parent=0 // pred_fallthru
    _
  %v14 = vld [vmem:[%s1] sm:$0x1]
  %v15 = vld [vmem:[%s1 + $0x1] sm:$0x1]
  %v16 = vlaneseq
  %v17 = vshrl.u32 %v16, 7
  %v18 = vadd.s32 %v17, 8
  %v19 = vadd.s32 %v17, 16
  %v20 = vadd.s32 %v17, 24
  %v21 = vadd.s32 %v17, 32
  %vm22 = vcmp.lt.s32.totalorder %v17, 0
  %v23 = vsub.s32 0, %v17
  %v24 = vsel %vm22, %v23, %v17
  %v25 = vshrl.u32 %v24, 1
  %v26 = vand.u32 %v24, 1
  %v27 = vsub.s32 0, %v26
  %v28 = vsel %vm22, %v27, %v26
  %vm29 = vcmp.lt.s32.totalorder %v18, 0
  %v30 = vsub.s32 0, %v18
  %v31 = vsel %vm29, %v30, %v18
  %v32 = vshrl.u32 %v31, 1
  %v33 = vand.u32 %v31, 1
  %v34 = vsub.s32 0, %v33
  %v35 = vsel %vm29, %v34, %v33
  %vm36 = vcmp.lt.s32.totalorder %v19, 0
  %v37 = vsub.s32 0, %v19
  %v38 = vsel %vm36, %v37, %v19
  %v39 = vshrl.u32 %v38, 1
  %v40 = vand.u32 %v38, 1
  %v41 = vsub.s32 0, %v40
  %v42 = vsel %vm36, %v41, %v40
  %vm43 = vcmp.lt.s32.totalorder %v20, 0
  %v44 = vsub.s32 0, %v20
  %v45 = vsel %vm43, %v44, %v20
  %v46 = vshrl.u32 %v45, 1
  %v47 = vand.u32 %v45, 1
  %v48 = vsub.s32 0, %v47
  %v49 = vsel %vm43, %v48, %v47
  %vm50 = vcmp.lt.s32.totalorder %v21, 0
  %v51 = vsub.s32 0, %v21
  %v52 = vsel %vm50, %v51, %v21
  %v53 = vshrl.u32 %v52, 1
  %v54 = vand.u32 %v52, 1
  %v55 = vsub.s32 0, %v54
  %v56 = vsel %vm50, %v55, %v54
  %vm57 = vcmp.ne.s32.totalorder %v28, 0
  %vm58 = vcmp.ne.s32.totalorder %v35, 0
  %vm59 = vcmp.ne.s32.totalorder %v42, 0
  %vm60 = vcmp.ne.s32.totalorder %v49, 0
  %vm61 = vcmp.ne.s32.totalorder %v56, 0
  %vm62 = vcmp.lt.s32.totalorder %v28, 0
  %vm63 = vcmp.lt.s32.totalorder %v35, 0
  %vm64 = vcmp.lt.s32.totalorder %v42, 0
  %vm65 = vcmp.lt.s32.totalorder %v49, 0
  %vm66 = vcmp.lt.s32.totalorder %v56, 0
  %vm67 = vmand %vm62, %vm57
  %vm68 = vmand %vm63, %vm58
  %vm69 = vmand %vm64, %vm59
  %vm70 = vmand %vm65, %vm60
  %vm71 = vmand %vm66, %vm61
  %v72 = vadd.s32 %v28, 2
  %v73 = vadd.s32 %v35, 2
  %v74 = vadd.s32 %v42, 2
  %v75 = vadd.s32 %v49, 2
  %v76 = vadd.s32 %v56, 2
  %v77 = vsel %vm67, %v72, %v28
  %v78 = vsel %vm68, %v73, %v35
  %v79 = vsel %vm69, %v74, %v42
  %v80 = vsel %vm70, %v75, %v49
  %v81 = vsel %vm71, %v76, %v56
  %vm82 = vcmp.eq.s32.totalorder %v77, 0
  %vm83 = vcmp.eq.s32.totalorder %v78, 0
  %vm84 = vcmp.eq.s32.totalorder %v79, 0
  %vm85 = vcmp.eq.s32.totalorder %v80, 0
  %vm86 = vcmp.eq.s32.totalorder %v81, 0
  %v87 = vsel %vm82, 1, 0
  %v88 = vsel %vm83, 1, 0
  %v89 = vsel %vm84, 1, 0
  %v90 = vsel %vm85, 1, 0
  %v91 = vsel %vm86, 1, 0
  %vm92 = vcmp.eq.s32.totalorder %v87, 1
  %vm93 = vcmp.eq.s32.totalorder %v88, 1
  %vm94 = vcmp.eq.s32.totalorder %v89, 1
  %vm95 = vcmp.eq.s32.totalorder %v90, 1
  %vm96 = vcmp.eq.s32.totalorder %v91, 1
  %v97 = vlaneseq
  %v98 = vshrl.u32 %v97, 7
  %v99 = vsub.s32 0, %v98
  %v100 = vrot.slane %v14, %v99
  %v101 = vlaneseq
  %v102 = vshrl.u32 %v101, 7
  %v103 = vsub.s32 0, %v102
  %v104 = vrot.slane %v15, %v103
  %v105 = vsel %vm92, %v100, %v104
  %v106 = vsel %vm93, %v100, %v104
  %v107 = vsel %vm94, %v100, %v104
  %v108 = vsel %vm95, %v100, %v104
  %v109 = vsel %vm96, %v100, %v104
  %v110 = vld [vmem:[%s2] sm:$0x1]
  %vm111 = vcmp.eq.s32.totalorder %v110, 0
  %v112 = vsel %vm111, 1, 0
  %v113 = vcvt.s32.f32 %v112
  %v114 = vld [vmem:[%s0] sm:$0xff]
  %v115 = vld [vmem:[%s0 + $0x8] sm:$0xff]
  %v116 = vld [vmem:[%s0 + $0x10] sm:$0xff]
  %v117 = vld [vmem:[%s0 + $0x18] sm:$0xff]
  %v118 = vld [vmem:[%s0 + $0x20] sm:$0xf]
  %120 = vset.pattern.permute.xlu0 0
  %121 = vperm.xlu0 %120, %v114
  %v122 = vpop.permute.xlu0 %121
  %125 = vset.pattern.permute.xlu0 0
  %126 = vperm.xlu0 %125, %v115
  %v127 = vpop.permute.xlu0 %126
  %130 = vset.pattern.permute.xlu0 0
  %131 = vperm.xlu0 %130, %v116
  %v132 = vpop.permute.xlu0 %131
  %135 = vset.pattern.permute.xlu0 0
  %136 = vperm.xlu0 %135, %v117
  %v137 = vpop.permute.xlu0 %136
  %140 = vset.pattern.permute.xlu0 0
  %141 = vperm.xlu0 %140, %v118
  %v142 = vpop.permute.xlu0 %141
  %v145 = vlaneseq
  %v146 = vshrl.u32 %v145, 7
  %v147 = vsub.s32 0, %v146
  %v148 = vrot.slane %v113, %v147
  %v150 = vmul.f32 %v122, %v148
  %v151 = vmul.f32 %v127, %v148
  %v152 = vmul.f32 %v132, %v148
  %v153 = vmul.f32 %v137, %v148
  %v154 = vmul.f32 %v142, %v148
  %v155 = vadd.f32 %v105, %v150
  %v156 = vadd.f32 %v106, %v151
  %v157 = vadd.f32 %v107, %v152
  %v158 = vadd.f32 %v108, %v153
  %v159 = vadd.f32 %v109, %v154
  %vm160 = vcmp.eq.s32.totalorder %v110, 1
  %v161 = vsel %vm160, 1, 0
  %v162 = vcvt.s32.f32 %v161
  %s163 = scalar_lea.vmem %s0, 40
  %v164 = vld [vmem:[%s163] sm:$0xff]
  %v165 = vld [vmem:[%s163 + $0x8] sm:$0xff]
  %v166 = vld [vmem:[%s163 + $0x10] sm:$0xff]
  %v167 = vld [vmem:[%s163 + $0x18] sm:$0xff]
  %v168 = vld [vmem:[%s163 + $0x20] sm:$0xf]
  %170 = vset.pattern.permute.xlu0 0
  %171 = vperm.xlu0 %170, %v164
  %v172 = vpop.permute.xlu0 %171
  %175 = vset.pattern.permute.xlu0 0
  %176 = vperm.xlu0 %175, %v165
  %v177 = vpop.permute.xlu0 %176
  %180 = vset.pattern.permute.xlu0 0
  %181 = vperm.xlu0 %180, %v166
  %v182 = vpop.permute.xlu0 %181
  %185 = vset.pattern.permute.xlu0 0
  %186 = vperm.xlu0 %185, %v167
  %v187 = vpop.permute.xlu0 %186
  %190 = vset.pattern.permute.xlu0 0
  %191 = vperm.xlu0 %190, %v168
  %v192 = vpop.permute.xlu0 %191
  %v195 = vlaneseq
  %v196 = vshrl.u32 %v195, 7
  %v197 = vsub.s32 0, %v196
  %v198 = vrot.slane %v162, %v197
  %v200 = vmul.f32 %v172, %v198
  %v201 = vmul.f32 %v177, %v198
  %v202 = vmul.f32 %v182, %v198
  %v203 = vmul.f32 %v187, %v198
  %v204 = vmul.f32 %v192, %v198
  %v205 = vadd.f32 %v155, %v200
  %v206 = vadd.f32 %v156, %v201
  %v207 = vadd.f32 %v157, %v202
  %v208 = vadd.f32 %v158, %v203
  %v209 = vadd.f32 %v159, %v204
  %vm210 = vcmp.eq.s32.totalorder %v110, 2
  %v211 = vsel %vm210, 1, 0
  %v212 = vcvt.s32.f32 %v211
  %s213 = scalar_lea.vmem %s0, 80
  %v214 = vld [vmem:[%s213] sm:$0xff]
  %v215 = vld [vmem:[%s213 + $0x8] sm:$0xff]
  %v216 = vld [vmem:[%s213 + $0x10] sm:$0xff]
  %v217 = vld [vmem:[%s213 + $0x18] sm:$0xff]
  %v218 = vld [vmem:[%s213 + $0x20] sm:$0xf]
  %220 = vset.pattern.permute.xlu0 0
  %221 = vperm.xlu0 %220, %v214
  %v222 = vpop.permute.xlu0 %221
  %225 = vset.pattern.permute.xlu0 0
  %226 = vperm.xlu0 %225, %v215
  %v227 = vpop.permute.xlu0 %226
  %230 = vset.pattern.permute.xlu0 0
  %231 = vperm.xlu0 %230, %v216
  %v232 = vpop.permute.xlu0 %231
  %235 = vset.pattern.permute.xlu0 0
  %236 = vperm.xlu0 %235, %v217
  %v237 = vpop.permute.xlu0 %236
  %240 = vset.pattern.permute.xlu0 0
  %241 = vperm.xlu0 %240, %v218
  %v242 = vpop.permute.xlu0 %241
  %v245 = vlaneseq
  %v246 = vshrl.u32 %v245, 7
  %v247 = vsub.s32 0, %v246
  %v248 = vrot.slane %v212, %v247
  %v250 = vmul.f32 %v222, %v248
  %v251 = vmul.f32 %v227, %v248
  %v252 = vmul.f32 %v232, %v248
  %v253 = vmul.f32 %v237, %v248
  %v254 = vmul.f32 %v242, %v248
  %v255 = vadd.f32 %v205, %v250
  %v256 = vadd.f32 %v206, %v251
  %v257 = vadd.f32 %v207, %v252
  %v258 = vadd.f32 %v208, %v253
  %v259 = vadd.f32 %v209, %v254
  %vm260 = vcmp.eq.s32.totalorder %v110, 3
  %v261 = vsel %vm260, 1, 0
  %v262 = vcvt.s32.f32 %v261
  %s263 = scalar_lea.vmem %s0, 120
  %v264 = vld [vmem:[%s263] sm:$0xff]
  %v265 = vld [vmem:[%s263 + $0x8] sm:$0xff]
  %v266 = vld [vmem:[%s263 + $0x10] sm:$0xff]
  %v267 = vld [vmem:[%s263 + $0x18] sm:$0xff]
  %v268 = vld [vmem:[%s263 + $0x20] sm:$0xf]
  %270 = vset.pattern.permute.xlu0 0
  %271 = vperm.xlu0 %270, %v264
  %v272 = vpop.permute.xlu0 %271
  %275 = vset.pattern.permute.xlu0 0
  %276 = vperm.xlu0 %275, %v265
  %v277 = vpop.permute.xlu0 %276
  %280 = vset.pattern.permute.xlu0 0
  %281 = vperm.xlu0 %280, %v266
  %v282 = vpop.permute.xlu0 %281
  %285 = vset.pattern.permute.xlu0 0
  %286 = vperm.xlu0 %285, %v267
  %v287 = vpop.permute.xlu0 %286
  %290 = vset.pattern.permute.xlu0 0
  %291 = vperm.xlu0 %290, %v268
  %v292 = vpop.permute.xlu0 %291
  %v295 = vlaneseq
  %v296 = vshrl.u32 %v295, 7
  %v297 = vsub.s32 0, %v296
  %v298 = vrot.slane %v262, %v297
  %v300 = vmul.f32 %v272, %v298
  %v301 = vmul.f32 %v277, %v298
  %v302 = vmul.f32 %v282, %v298
  %v303 = vmul.f32 %v287, %v298
  %v304 = vmul.f32 %v292, %v298
  %v305 = vadd.f32 %v255, %v300
  %v306 = vadd.f32 %v256, %v301
  %v307 = vadd.f32 %v257, %v302
  %v308 = vadd.f32 %v258, %v303
  %v309 = vadd.f32 %v259, %v304
  %vm310 = vcmp.eq.s32.totalorder %v110, 4
  %v311 = vsel %vm310, 1, 0
  %v312 = vcvt.s32.f32 %v311
  %s313 = scalar_lea.vmem %s0, 160
  %v314 = vld [vmem:[%s313] sm:$0xff]
  %v315 = vld [vmem:[%s313 + $0x8] sm:$0xff]
  %v316 = vld [vmem:[%s313 + $0x10] sm:$0xff]
  %v317 = vld [vmem:[%s313 + $0x18] sm:$0xff]
  %v318 = vld [vmem:[%s313 + $0x20] sm:$0xf]
  %320 = vset.pattern.permute.xlu0 0
  %321 = vperm.xlu0 %320, %v314
  %v322 = vpop.permute.xlu0 %321
  %325 = vset.pattern.permute.xlu0 0
  %326 = vperm.xlu0 %325, %v315
  %v327 = vpop.permute.xlu0 %326
  %330 = vset.pattern.permute.xlu0 0
  %331 = vperm.xlu0 %330, %v316
  %v332 = vpop.permute.xlu0 %331
  %335 = vset.pattern.permute.xlu0 0
  %336 = vperm.xlu0 %335, %v317
  %v337 = vpop.permute.xlu0 %336
  %340 = vset.pattern.permute.xlu0 0
  %341 = vperm.xlu0 %340, %v318
  %v342 = vpop.permute.xlu0 %341
  %v345 = vlaneseq
  %v346 = vshrl.u32 %v345, 7
  %v347 = vsub.s32 0, %v346
  %v348 = vrot.slane %v312, %v347
  %v350 = vmul.f32 %v322, %v348
  %v351 = vmul.f32 %v327, %v348
  %v352 = vmul.f32 %v332, %v348
  %v353 = vmul.f32 %v337, %v348
  %v354 = vmul.f32 %v342, %v348
  %v355 = vadd.f32 %v305, %v350
  %v356 = vadd.f32 %v306, %v351
  %v357 = vadd.f32 %v307, %v352
  %v358 = vadd.f32 %v308, %v353
  %v359 = vadd.f32 %v309, %v354
  %360 = vst [vmem:[%s3] sm:$0xff] %v355
  %361 = vst [vmem:[%s3 + $0x8] sm:$0xff] %v356
  %362 = vst [vmem:[%s3 + $0x10] sm:$0xff] %v357
  %363 = vst [vmem:[%s3 + $0x18] sm:$0xff] %v358
  %364 = vst [vmem:[%s3 + $0x20] sm:$0xf] %v359
  // Predicated region
  $region14: #{_fused_shift_call.1} parent=0 // pred_check
    _
  $region15: #{_fused_shift_call.1} parent=0 // pred_check_branch
    %366 = sbr.rel (0) target = $region17
  $region16: #{_fused_shift_call.1} parent=0 // pred_region
    _
  $region17: #{_fused_shift_call.1} parent=0 // pred_fallthru
    _
  // Predicated region
  $region18: #{_fused_shift_call.1} parent=0 // pred_check
    _
  $region19: #{_fused_shift_call.1} parent=0 // pred_check_branch
    %368 = sbr.rel (0) target = $region21
  $region20: #{_fused_shift_call.1} parent=0 // pred_region
    _
  $region21: #{_fused_shift_call.1} parent=0 // pred_fallthru
    _

</llo_original>
